<compile_context>
chip_gen: v7x
topology: tpu7x:2x2x1
jax: 0.10.0
libtpu: 0.0.40
codegen_flags: <defaults>
</compile_context>

<pallas_src>
import functools

import jax
import jax.numpy as jnp
from jax.experimental import pallas as pl
from jax.experimental.pallas import tpu as pltpu


def mixconv_kernel(x_ref, wdw_ref, s2_ref, b2_ref, w1_ref, b1_ref,
                   s3_ref, b3_ref, out_ref, *, dilation, left):
    """One batch group: depthwise conv -> ReLU -> BN -> +residual ->
    1x1 conv (MXU) -> ReLU -> BN, on a (BB, C, L) block in natural layout."""
    BB, C, L = x_ref.shape
    wdw = wdw_ref[...]                    # (C, K) depthwise weights
    K = wdw.shape[1]
    s2 = s2_ref[...]                      # (C, 1)   folded bn_2 scale
    b2 = b2_ref[...]                      # (C, 1)   folded bn_2 bias
    w1 = w1_ref[...]                      # (Cout, C) 1x1 conv weight (matmul dtype)
    b1 = b1_ref[...]                      # (Cout, 1)
    s3 = s3_ref[...]                      # (Cout, 1) folded bn_3 scale
    b3 = b3_ref[...]                      # (Cout, 1) folded bn_3 bias

    # Lane position inside the sequence; per-tap shift / weight / validity mask
    # are hoisted out of the batch loop (JAX does not CSE broadcasts).
    t = jax.lax.broadcasted_iota(jnp.int32, (1, L), 1)
    taps = []
    for j in range(K):
        s = j * dilation - left           # static lane shift of tap j
        w_j = wdw[:, j:j + 1]             # (C, 1)
        if s == 0:
            taps.append((0, w_j, None))   # center tap: no shift, no mask
        else:
            valid = (t >= -s) if s < 0 else (t < L - s)
            taps.append((s, w_j, valid))

    for b in range(BB):                   # BB is small & static -> unrolled
        xb = x_ref[b]                     # (C, L) f32

        # Depthwise 'same' conv: out[:, t] = sum_j w[:, j] * x[:, t + j*d - left],
        # zero outside [0, L).  Lane shifts via pltpu.roll; wrap-around across
        # the sequence boundary is masked off.
        acc = None
        for s, w_j, valid in taps:
            if valid is None:
                term = w_j * xb
            else:
                rolled = pltpu.roll(xb, (-s) % L, 1)  # rolled[:, t] = xb[:, (t+s) % L]
                term = w_j * jnp.where(valid, rolled, 0.0)
            acc = term if acc is None else acc + term  # first tap inits (no zero pass)

        h = jnp.maximum(acc, 0.0)              # act_2 (ReLU)
        h = h * s2 + b2                        # bn_2 (folded, inference)
        h = h + xb                             # residual

        # conv_1: kernel_size=1 conv == channel matmul on the MXU.
        y = jnp.dot(w1, h.astype(w1.dtype),
                    preferred_element_type=jnp.float32) + b1
        y = jnp.maximum(y, 0.0)                # act_3 (ReLU)
        y = y * s3 + b3                        # bn_3 (folded, inference)
        out_ref[b] = y.astype(out_ref.dtype)


def _vmem_capacity_bytes():
    """Physical VMEM of the current TPU generation; conservative fallback."""
    try:
        return int(pltpu.get_tpu_info().vmem_capacity_bytes)
    except Exception:
        return 64 << 20                    # v7x per-TC VMEM (smallest)


def _pick_batch_group(B, C, L, Cout, K, *, in_itemsize=4, out_itemsize=4,
                      target_step_bytes=4 << 20):
    """Pick the per-step batch-group size BB (a divisor of B) and a VMEM limit.

    Priorities:
      1. fit comfortably in VMEM (double-buffered I/O tiles + live f32 temps)
      2. keep G = B // BB >= 2 (and even) so the "parallel" grid axis can be
         sharded across v7x's 2 TensorCores
      3. grow the per-step HBM traffic toward `target_step_bytes` to amortize
         the ~0.35 us fixed per-grid-step overhead
      4. bound the unrolled in-kernel work (BB sequences x K taps).
    """
    cap = _vmem_capacity_bytes()
    budget = int(0.6 * cap)
    max_unroll = max(1, min(8, 256 // max(K, 1)))

    const_bytes = 2 * (C * K * 4 + 2 * C * 4 + 3 * Cout * 4 + Cout * C * 2)

    def vmem_need(bb):
        tiles = 2 * bb * L * (C * in_itemsize + Cout * out_itemsize)   # dbl-buffered I/O
        interm = bb * L * (3 * C + 2 * Cout) * 4                       # live f32 temps
        return tiles + interm + const_bytes

    def step_bytes(bb):
        return bb * L * (C * in_itemsize + Cout * out_itemsize)

    divisors = [d for d in range(1, B + 1) if B % d == 0 and d <= max_unroll]
    fitting = [d for d in divisors if vmem_need(d) <= budget] or [1]

    def score(bb):
        G = B // bb
        return (G >= 2,                                   # >= 2 steps: v7x megacore
                G % 2 == 0 or G == 1,                     # even split over 2 TCs
                min(step_bytes(bb), target_step_bytes),   # amortize per-step overhead
                -bb)                                      # tie-break: less unroll
    bb = max(fitting, key=score)

    vmem_limit = min(int(0.72 * cap), max(vmem_need(bb) + (4 << 20), 32 << 20))
    return bb, vmem_limit


def mixconv_forward(x, params, *, dilation=1, matmul_dtype=jnp.bfloat16,
                    out_dtype=None):
    """x: (B, C, L). Returns (B, Cout, L) in out_dtype (default: x.dtype)."""
    B, C, L = x.shape
    wdw = params["w_dw"]                               # (C, K)
    K = wdw.shape[1]
    Cout = params["w1"].shape[0]
    out_dtype = x.dtype if out_dtype is None else jnp.dtype(out_dtype)

    # PyTorch 'same': total = d*(K-1), left = total//2 (extra pad on the right).
    left = (dilation * (K - 1)) // 2

    BB, vmem_limit = _pick_batch_group(
        B, C, L, Cout, K,
        in_itemsize=x.dtype.itemsize, out_itemsize=jnp.dtype(out_dtype).itemsize)
    G = B // BB

    w1 = params["w1"].astype(matmul_dtype)             # bf16 MXU operands, f32 acc

    kernel = functools.partial(mixconv_kernel, dilation=dilation, left=left)

    flops = 2 * B * L * Cout * C + 2 * B * L * C * K + 6 * B * L * (C + Cout)
    bytes_accessed = (B * C * L * x.dtype.itemsize
                      + B * Cout * L * jnp.dtype(out_dtype).itemsize
                      + (C * K + 2 * C + 3 * Cout) * 4
                      + Cout * C * 2)

    out = pl.pallas_call(
        kernel,
        out_shape=jax.ShapeDtypeStruct((B, Cout, L), out_dtype),
        grid=(G,),
        in_specs=[
            pl.BlockSpec((BB, C, L), lambda g: (g, 0, 0)),   # input (also residual)
            pl.BlockSpec((C, K), lambda g: (0, 0)),          # depthwise weights
            pl.BlockSpec((C, 1), lambda g: (0, 0)),          # bn_2 scale (folded)
            pl.BlockSpec((C, 1), lambda g: (0, 0)),          # bn_2 bias  (folded)
            pl.BlockSpec((Cout, C), lambda g: (0, 0)),       # 1x1 conv weight (bf16)
            pl.BlockSpec((Cout, 1), lambda g: (0, 0)),       # 1x1 conv bias
            pl.BlockSpec((Cout, 1), lambda g: (0, 0)),       # bn_3 scale (folded)
            pl.BlockSpec((Cout, 1), lambda g: (0, 0)),       # bn_3 bias  (folded)
        ],
        out_specs=pl.BlockSpec((BB, Cout, L), lambda g: (g, 0, 0)),
        compiler_params=pltpu.CompilerParams(
            dimension_semantics=("parallel",),
            vmem_limit_bytes=int(vmem_limit)),
        cost_estimate=pl.CostEstimate(flops=int(flops), transcendentals=0,
                                      bytes_accessed=int(bytes_accessed)),
    )(x, wdw, params["s2"], params["b2"], w1, params["b1"],
      params["s3"], params["b3"])

    return out


def reference_forward(x, params, *, dilation=1, matmul_dtype=jnp.bfloat16):
    """Pure-JAX reference of the same math (validation only)."""
    B, C, L = x.shape
    wdw = params["w_dw"]
    K = wdw.shape[1]
    total = dilation * (K - 1)
    left = total // 2
    xpad = jnp.pad(x, ((0, 0), (0, 0), (left, total - left)))
    acc = jnp.zeros((B, C, L), jnp.float32)
    for j in range(K):
        acc = acc + wdw[None, :, j:j + 1] * xpad[:, :, j * dilation: j * dilation + L]
    h = jnp.maximum(acc, 0.0) * params["s2"][None] + params["b2"][None] + x
    y = jnp.einsum("oc,bcl->bol",
                   params["w1"].astype(matmul_dtype), h.astype(matmul_dtype),
                   preferred_element_type=jnp.float32) + params["b1"][None]
    y = jnp.maximum(y, 0.0) * params["s3"][None] + params["b3"][None]
    return y


def fold_bn(gamma, beta, mean, var, eps=1e-5):
    scale = gamma / jnp.sqrt(var + eps)
    bias = beta - mean * scale
    return scale, bias


if __name__ == "__main__":
    # Small shapes consistent with Mixconv(channal=Cout, kersize=K, m=dilation,
    # c=1, dim_in=C).  L = 128 -> lane-dense blocks (unmasked vector stores);
    # B = 2 -> grid of 2 steps so v7x can use both TensorCores.
    B, C, L = 2, 16, 128     # batch, dim_in, sequence length
    K = 4                    # kersize (even -> asymmetric 'same' pad like PyTorch)
    Cout = 32                # channal
    dilation = 1             # m

    key = jax.random.PRNGKey(0)
    ks = jax.random.split(key, 12)
    x = jax.random.normal(ks[0], (B, C, L), jnp.float32)

    # Deterministic synthetic parameters matching PyTorch shapes.
    w_dw = 0.1 * jax.random.normal(ks[1], (C, K), jnp.float32)        # Conv1d (C,1,K) squeezed
    gamma2 = 1.0 + 0.1 * jax.random.normal(ks[2], (C, 1), jnp.float32)
    beta2 = 0.1 * jax.random.normal(ks[3], (C, 1), jnp.float32)
    mean2 = 0.1 * jax.random.normal(ks[4], (C, 1), jnp.float32)
    var2 = 0.5 + jnp.abs(jax.random.normal(ks[5], (C, 1), jnp.float32))
    w1 = 0.1 * jax.random.normal(ks[6], (Cout, C), jnp.float32)       # Conv1d (Cout,C,1) squeezed
    b1 = 0.1 * jax.random.normal(ks[7], (Cout, 1), jnp.float32)
    gamma3 = 1.0 + 0.1 * jax.random.normal(ks[8], (Cout, 1), jnp.float32)
    beta3 = 0.1 * jax.random.normal(ks[9], (Cout, 1), jnp.float32)
    mean3 = 0.1 * jax.random.normal(ks[10], (Cout, 1), jnp.float32)
    var3 = 0.5 + jnp.abs(jax.random.normal(ks[11], (Cout, 1), jnp.float32))

    s2, b2 = fold_bn(gamma2, beta2, mean2, var2)
    s3, b3 = fold_bn(gamma3, beta3, mean3, var3)

    params = dict(w_dw=w_dw, s2=s2, b2=b2, w1=w1, b1=b1, s3=s3, b3=b3)

    out = mixconv_forward(x, params, dilation=dilation)
    out = jax.block_until_ready(out)

    ref = reference_forward(x, params, dilation=dilation)
    assert out.shape == (B, Cout, L)
    assert jnp.allclose(out, ref, atol=1e-3, rtol=1e-3), "mismatch vs pure-JAX reference"

    print("KERNEL_OK")
</pallas_src>

<mosaic_0001>
module attributes {stable_mosaic.version = 11 : i64} {
  func.func @mixconv_kernel(%arg0: i32, %arg1: memref<1x16x128xf32, #tpu.memory_space<vmem>>, %arg2: memref<16x4xf32, #tpu.memory_space<vmem>>, %arg3: memref<16x1xf32, #tpu.memory_space<vmem>>, %arg4: memref<16x1xf32, #tpu.memory_space<vmem>>, %arg5: memref<32x16xbf16, #tpu.memory_space<vmem>>, %arg6: memref<32x1xf32, #tpu.memory_space<vmem>>, %arg7: memref<32x1xf32, #tpu.memory_space<vmem>>, %arg8: memref<32x1xf32, #tpu.memory_space<vmem>>, %arg9: memref<1x32x128xf32, #tpu.memory_space<vmem>>) attributes {dimension_semantics = [#tpu.dimension_semantics<parallel>], iteration_bounds = array<i64: 2>, scalar_prefetch = 0 : i64, scratch_operands = 0 : i64, tpu.core_type = #tpu.core_type<tc>, window_params = [{transform_indices = @transform_0, window_bounds = array<i64: 1, 16, 128>}, {pipeline_mode = #tpu.pipeline_mode<synchronous>, transform_indices = @transform_1, window_bounds = array<i64: 16, 4>}, {pipeline_mode = #tpu.pipeline_mode<synchronous>, transform_indices = @transform_2, window_bounds = array<i64: 16, 1>}, {pipeline_mode = #tpu.pipeline_mode<synchronous>, transform_indices = @transform_3, window_bounds = array<i64: 16, 1>}, {pipeline_mode = #tpu.pipeline_mode<synchronous>, transform_indices = @transform_4, window_bounds = array<i64: 32, 16>}, {pipeline_mode = #tpu.pipeline_mode<synchronous>, transform_indices = @transform_5, window_bounds = array<i64: 32, 1>}, {pipeline_mode = #tpu.pipeline_mode<synchronous>, transform_indices = @transform_6, window_bounds = array<i64: 32, 1>}, {pipeline_mode = #tpu.pipeline_mode<synchronous>, transform_indices = @transform_7, window_bounds = array<i64: 32, 1>}, {transform_indices = @transform_8, window_bounds = array<i64: 1, 32, 128>}]} {
    %c0 = arith.constant 0 : index
    %c0_0 = arith.constant 0 : index
    %0 = vector.load %arg2[%c0, %c0_0] : memref<16x4xf32, #tpu.memory_space<vmem>>, vector<16x4xf32>
    %c0_1 = arith.constant 0 : index
    %c0_2 = arith.constant 0 : index
    %1 = vector.load %arg3[%c0_1, %c0_2] : memref<16x1xf32, #tpu.memory_space<vmem>>, vector<16x1xf32>
    %c0_3 = arith.constant 0 : index
    %c0_4 = arith.constant 0 : index
    %2 = vector.load %arg4[%c0_3, %c0_4] : memref<16x1xf32, #tpu.memory_space<vmem>>, vector<16x1xf32>
    %c0_5 = arith.constant 0 : index
    %c0_6 = arith.constant 0 : index
    %3 = vector.load %arg5[%c0_5, %c0_6] : memref<32x16xbf16, #tpu.memory_space<vmem>>, vector<32x16xbf16>
    %c0_7 = arith.constant 0 : index
    %c0_8 = arith.constant 0 : index
    %4 = vector.load %arg6[%c0_7, %c0_8] : memref<32x1xf32, #tpu.memory_space<vmem>>, vector<32x1xf32>
    %c0_9 = arith.constant 0 : index
    %c0_10 = arith.constant 0 : index
    %5 = vector.load %arg7[%c0_9, %c0_10] : memref<32x1xf32, #tpu.memory_space<vmem>>, vector<32x1xf32>
    %c0_11 = arith.constant 0 : index
    %c0_12 = arith.constant 0 : index
    %6 = vector.load %arg8[%c0_11, %c0_12] : memref<32x1xf32, #tpu.memory_space<vmem>>, vector<32x1xf32>
    %7 = tpu.iota {dimensions = array<i32: 1>} : vector<1x128xi32>
    %8 = vector.extract_strided_slice %0 {offsets = [0, 0], sizes = [16, 1], strides = [1, 1]} : vector<16x4xf32> to vector<16x1xf32>
    %c1_i32 = arith.constant 1 : i32
    %9 = vector.broadcast %c1_i32 : i32 to vector<1x128xi32>
    %10 = arith.cmpi sge, %7, %9 : vector<1x128xi32>
    %11 = vector.extract_strided_slice %0 {offsets = [0, 1], sizes = [16, 1], strides = [1, 1]} : vector<16x4xf32> to vector<16x1xf32>
    %12 = vector.extract_strided_slice %0 {offsets = [0, 2], sizes = [16, 1], strides = [1, 1]} : vector<16x4xf32> to vector<16x1xf32>
    %c127_i32 = arith.constant 127 : i32
    %13 = vector.broadcast %c127_i32 : i32 to vector<1x128xi32>
    %14 = arith.cmpi slt, %7, %13 : vector<1x128xi32>
    %15 = vector.extract_strided_slice %0 {offsets = [0, 3], sizes = [16, 1], strides = [1, 1]} : vector<16x4xf32> to vector<16x1xf32>
    %c126_i32 = arith.constant 126 : i32
    %16 = vector.broadcast %c126_i32 : i32 to vector<1x128xi32>
    %17 = arith.cmpi slt, %7, %16 : vector<1x128xi32>
    %c0_13 = arith.constant 0 : index
    %c0_14 = arith.constant 0 : index
    %c0_15 = arith.constant 0 : index
    %18 = vector.load %arg1[%c0_13, %c0_14, %c0_15] : memref<1x16x128xf32, #tpu.memory_space<vmem>>, vector<1x16x128xf32>
    %19 = vector.shape_cast %18 : vector<1x16x128xf32> to vector<16x128xf32>
    %c1_i32_16 = arith.constant 1 : i32
    %20 = tpu.dynamic_rotate %19 by %c1_i32_16 dim 1 : vector<16x128xf32>, i32 -> vector<16x128xf32>
    %cst = arith.constant 0.000000e+00 : f32
    %21 = vector.shape_cast %10 : vector<1x128xi1> to vector<1x128xi1>
    %22 = vector.broadcast %21 : vector<1x128xi1> to vector<16x128xi1>
    %23 = vector.broadcast %cst : f32 to vector<16x128xf32>
    %24 = arith.select %22, %20, %23 : vector<16x128xi1>, vector<16x128xf32>
    %25 = vector.broadcast %8 : vector<16x1xf32> to vector<16x128xf32>
    %26 = arith.mulf %25, %24 : vector<16x128xf32>
    %27 = vector.broadcast %11 : vector<16x1xf32> to vector<16x128xf32>
    %28 = arith.mulf %27, %19 : vector<16x128xf32>
    %29 = arith.addf %26, %28 : vector<16x128xf32>
    %c127_i32_17 = arith.constant 127 : i32
    %30 = tpu.dynamic_rotate %19 by %c127_i32_17 dim 1 : vector<16x128xf32>, i32 -> vector<16x128xf32>
    %cst_18 = arith.constant 0.000000e+00 : f32
    %31 = vector.shape_cast %14 : vector<1x128xi1> to vector<1x128xi1>
    %32 = vector.broadcast %31 : vector<1x128xi1> to vector<16x128xi1>
    %33 = vector.broadcast %cst_18 : f32 to vector<16x128xf32>
    %34 = arith.select %32, %30, %33 : vector<16x128xi1>, vector<16x128xf32>
    %35 = vector.broadcast %12 : vector<16x1xf32> to vector<16x128xf32>
    %36 = arith.mulf %35, %34 : vector<16x128xf32>
    %37 = arith.addf %29, %36 : vector<16x128xf32>
    %c126_i32_19 = arith.constant 126 : i32
    %38 = tpu.dynamic_rotate %19 by %c126_i32_19 dim 1 : vector<16x128xf32>, i32 -> vector<16x128xf32>
    %cst_20 = arith.constant 0.000000e+00 : f32
    %39 = vector.shape_cast %17 : vector<1x128xi1> to vector<1x128xi1>
    %40 = vector.broadcast %39 : vector<1x128xi1> to vector<16x128xi1>
    %41 = vector.broadcast %cst_20 : f32 to vector<16x128xf32>
    %42 = arith.select %40, %38, %41 : vector<16x128xi1>, vector<16x128xf32>
    %43 = vector.broadcast %15 : vector<16x1xf32> to vector<16x128xf32>
    %44 = arith.mulf %43, %42 : vector<16x128xf32>
    %45 = arith.addf %37, %44 : vector<16x128xf32>
    %cst_21 = arith.constant 0.000000e+00 : f32
    %46 = vector.broadcast %cst_21 : f32 to vector<16x128xf32>
    %47 = arith.maximumf %45, %46 : vector<16x128xf32>
    %48 = vector.broadcast %1 : vector<16x1xf32> to vector<16x128xf32>
    %49 = arith.mulf %47, %48 : vector<16x128xf32>
    %50 = vector.broadcast %2 : vector<16x1xf32> to vector<16x128xf32>
    %51 = arith.addf %49, %50 : vector<16x128xf32>
    %52 = arith.addf %51, %19 : vector<16x128xf32>
    %53 = arith.truncf %52 : vector<16x128xf32> to vector<16x128xbf16>
    %cst_22 = arith.constant dense<0.000000e+00> : vector<32x128xf32>
    %54 = tpu.matmul %3, %53, %cst_22 {dimension_numbers = #tpu.dot_dimension_numbers<[1], [0], [0], [1], [0, 0, 1, 1], [], []>} : vector<32x16xbf16>, vector<16x128xbf16>, vector<32x128xf32> -> vector<32x128xf32>
    %55 = vector.broadcast %4 : vector<32x1xf32> to vector<32x128xf32>
    %56 = arith.addf %54, %55 : vector<32x128xf32>
    %cst_23 = arith.constant 0.000000e+00 : f32
    %57 = vector.broadcast %cst_23 : f32 to vector<32x128xf32>
    %58 = arith.maximumf %56, %57 : vector<32x128xf32>
    %59 = vector.broadcast %5 : vector<32x1xf32> to vector<32x128xf32>
    %60 = arith.mulf %58, %59 : vector<32x128xf32>
    %61 = vector.broadcast %6 : vector<32x1xf32> to vector<32x128xf32>
    %62 = arith.addf %60, %61 : vector<32x128xf32>
    %c0_24 = arith.constant 0 : index
    %c0_25 = arith.constant 0 : index
    %c0_26 = arith.constant 0 : index
    %63 = vector.load %arg9[%c0_24, %c0_25, %c0_26] : memref<1x32x128xf32, #tpu.memory_space<vmem>>, vector<1x32x128xf32>
    %64 = vector.shape_cast %63 : vector<1x32x128xf32> to vector<32x128xf32>
    %65 = vector.shape_cast %62 : vector<32x128xf32> to vector<1x32x128xf32>
    tpu.vector_store %arg9[%c0_24, %c0_25, %c0_26], %65 {strides = array<i32>} : memref<1x32x128xf32, #tpu.memory_space<vmem>>, vector<1x32x128xf32>,
    return
  }
  func.func @transform_0(%arg0: i32) -> (i32, i32, i32) {
    %c0_i32 = arith.constant 0 : i32
    %c0_i32_0 = arith.constant 0 : i32
    %c0_i32_1 = arith.constant 0 : i32
    return %arg0, %c0_i32, %c0_i32_0 : i32, i32, i32
  }
  func.func @transform_1(%arg0: i32) -> (i32, i32) {
    %c0_i32 = arith.constant 0 : i32
    %c0_i32_0 = arith.constant 0 : i32
    %c0_i32_1 = arith.constant 0 : i32
    return %c0_i32, %c0_i32_0 : i32, i32
  }
  func.func @transform_2(%arg0: i32) -> (i32, i32) {
    %c0_i32 = arith.constant 0 : i32
    %c0_i32_0 = arith.constant 0 : i32
    %c0_i32_1 = arith.constant 0 : i32
    return %c0_i32, %c0_i32_0 : i32, i32
  }
  func.func @transform_3(%arg0: i32) -> (i32, i32) {
    %c0_i32 = arith.constant 0 : i32
    %c0_i32_0 = arith.constant 0 : i32
    %c0_i32_1 = arith.constant 0 : i32
    return %c0_i32, %c0_i32_0 : i32, i32
  }
  func.func @transform_4(%arg0: i32) -> (i32, i32) {
    %c0_i32 = arith.constant 0 : i32
    %c0_i32_0 = arith.constant 0 : i32
    %c0_i32_1 = arith.constant 0 : i32
    return %c0_i32, %c0_i32_0 : i32, i32
  }
  func.func @transform_5(%arg0: i32) -> (i32, i32) {
    %c0_i32 = arith.constant 0 : i32
    %c0_i32_0 = arith.constant 0 : i32
    %c0_i32_1 = arith.constant 0 : i32
    return %c0_i32, %c0_i32_0 : i32, i32
  }
  func.func @transform_6(%arg0: i32) -> (i32, i32) {
    %c0_i32 = arith.constant 0 : i32
    %c0_i32_0 = arith.constant 0 : i32
    %c0_i32_1 = arith.constant 0 : i32
    return %c0_i32, %c0_i32_0 : i32, i32
  }
  func.func @transform_7(%arg0: i32) -> (i32, i32) {
    %c0_i32 = arith.constant 0 : i32
    %c0_i32_0 = arith.constant 0 : i32
    %c0_i32_1 = arith.constant 0 : i32
    return %c0_i32, %c0_i32_0 : i32, i32
  }
  func.func @transform_8(%arg0: i32) -> (i32, i32, i32) {
    %c0_i32 = arith.constant 0 : i32
    %c0_i32_0 = arith.constant 0 : i32
    %c0_i32_1 = arith.constant 0 : i32
    return %arg0, %c0_i32, %c0_i32_0 : i32, i32, i32
  }
}

</mosaic_0001>

<llo_original>
// kernel: tpu_custom_call.1
$region0: #{tpu_custom_call.1}
  #allocation0 [shape = 'u32[]', space=smem, size = 0x4, offset = 0x4, fixed_abs, tag = 'smem constant byte address 0x4 - core index']
  #allocation1 [shape = 'u32[144,128]{1,0:T(1,128)}', space=vmem, size = 0x12000, scoped, tag = 'internal scratch']
  %s0 = inlined_call_operand.vmem [shape: f32[2,16,128], index: 0, kind: input, shape index: {}]
  %s1 = inlined_call_operand.vmem [shape: f32[16,4], index: 1, kind: input, shape index: {}]
  %s2 = inlined_call_operand.vmem [shape: f32[16,1], index: 2, kind: input, shape index: {}]
  %s3 = inlined_call_operand.vmem [shape: f32[16,1], index: 3, kind: input, shape index: {}]
  %s4 = inlined_call_operand.vmem [shape: bf16[32,16], index: 4, kind: input, shape index: {}]
  %s5 = inlined_call_operand.vmem [shape: f32[32,1], index: 5, kind: input, shape index: {}]
  %s6 = inlined_call_operand.vmem [shape: f32[32,1], index: 6, kind: input, shape index: {}]
  %s7 = inlined_call_operand.vmem [shape: f32[32,1], index: 7, kind: input, shape index: {}]
  %s8 = inlined_call_operand.hbm [shape: f32[2,32,128], index: 8, kind: output, shape index: {}]
  %s9 = sld [smem:[#allocation0]]
  $region65: #{tpu_custom_call.1} parent=0
    _
  %s11 = ssub.s32 1, %s9
  %s12 = scalar_select 0, %s11, %s9
  $region1: #{tpu_custom_call.1} parent=0
    #allocation2 [shape = 'u8[32768]{0}', space=vmem, size = 0x8000, scoped, tag = 'output window, operand 0']
    #allocation3 [shape = 's32[2]{0}', space=sflag, size = 0x8, scoped, tag = 'scoped memory for tpu_custom_call.1']
    %13 = vsyncpa [#allocation3], 0
    %s14 = scalar_lea.sflag [#allocation3], 1
    %15 = vsyncpa %s14, 0
    loop: start=0, step=1, limit=4
    $region2: #{tpu_custom_call.1} parent=1 // loop_pre_header
      _
    $region3: #{tpu_custom_call.1} parent=1 // loop_header
      %s17 = sphi 0, %s21
      %p18 = scmp.ge.s32.totalorder %s17, 4
      %s27 = sphi 0, %s29
      %s30 = sphi 0, %s27
      %s31 = sphi 0, %s30
      %s47 = sphi 0, %s31
      %s51 = sphi 0, %s51
      %s53 = sphi 0, %s51
      %s54 = sphi 0, %s53
      %s68 = sphi 0, %s54
      %s72 = sphi 0, %s72
      %s74 = sphi 0, %s72
      %s75 = sphi 0, %s74
      %s89 = sphi 0, %s75
      %s93 = sphi 0, %s93
      %s95 = sphi 0, %s93
      %s96 = sphi 0, %s95
      %s110 = sphi 0, %s96
      %s114 = sphi 0, %s114
      %s116 = sphi 0, %s114
      %s117 = sphi 0, %s116
      %s131 = sphi 0, %s117
      %s135 = sphi 0, %s135
      %s137 = sphi 0, %s135
      %s138 = sphi 0, %s137
      %s152 = sphi 0, %s138
      %s156 = sphi 0, %s156
      %s158 = sphi 0, %s156
      %s159 = sphi 0, %s158
      %s173 = sphi 0, %s159
      %s177 = sphi 0, %s177
      %s179 = sphi 0, %s177
      %s180 = sphi 0, %s179
      %s194 = sphi 0, %s180
      %s200 = sphi 0, %s202
      %s203 = sphi 0, %s200
      %s204 = sphi 0, %s203
      %s220 = sphi 0, %s204
    $region4: #{tpu_custom_call.1} parent=1 // loop_header_branch
      %20 = sbr.rel (%p18) target = $region8
    $region5: #{tpu_custom_call.1} parent=1 // loop_body
      %s22 = ssub.s32 %s17, 1
      %s23 = ssub.s32 %s17, 2
      %s24 = sadd.s32 %s17, 1
      %s25 = ssub.s32 %s17, %s24
      %p26 = scmp.eq.s32.totalorder %s25, 0
      %s28 = sadd.s32 %s27, 1
      %s29 = scalar_select %p26, %s27, %s28
      %p32 = pneg %p26
      %p33 = scmp.eq.s32.totalorder %s17, 1
      %p34 = por %p32, %p33
      %p35 = scmp.ne.s32.totalorder %s27, %s30
      %p36 = scmp.eq.s32.totalorder %s17, 0
      %p37 = por %p35, %p36
      %p38 = scmp.ne.s32.totalorder %s27, %s30
      %p39 = scmp.eq.s32.totalorder %s22, 1
      %p40 = por %p38, %p39
      %p41 = scmp.ne.s32.totalorder %s30, %s31
      %p42 = scmp.eq.s32.totalorder %s22, 0
      %p43 = por %p41, %p42
      %p44 = scmp.ne.s32.totalorder %s30, %s31
      %p45 = scmp.eq.s32.totalorder %s23, 1
      %p46 = por %p44, %p45
      %p48 = scmp.ne.s32.totalorder %s31, %s47
      %p49 = scmp.eq.s32.totalorder %s23, 0
      %p50 = por %p48, %p49
      %s52 = sadd.s32 %s51, 1
      %p55 = scmp.eq.s32.totalorder %s17, 1
      %p56 = scmp.ne.s32.totalorder %s51, %s53
      %p57 = scmp.eq.s32.totalorder %s17, 0
      %p58 = por %p56, %p57
      %p59 = scmp.ne.s32.totalorder %s51, %s53
      %p60 = scmp.eq.s32.totalorder %s22, 1
      %p61 = por %p59, %p60
      %p62 = scmp.ne.s32.totalorder %s53, %s54
      %p63 = scmp.eq.s32.totalorder %s22, 0
      %p64 = por %p62, %p63
      %p65 = scmp.ne.s32.totalorder %s53, %s54
      %p66 = scmp.eq.s32.totalorder %s23, 1
      %p67 = por %p65, %p66
      %p69 = scmp.ne.s32.totalorder %s54, %s68
      %p70 = scmp.eq.s32.totalorder %s23, 0
      %p71 = por %p69, %p70
      %s73 = sadd.s32 %s72, 1
      %p76 = scmp.eq.s32.totalorder %s17, 1
      %p77 = scmp.ne.s32.totalorder %s72, %s74
      %p78 = scmp.eq.s32.totalorder %s17, 0
      %p79 = por %p77, %p78
      %p80 = scmp.ne.s32.totalorder %s72, %s74
      %p81 = scmp.eq.s32.totalorder %s22, 1
      %p82 = por %p80, %p81
      %p83 = scmp.ne.s32.totalorder %s74, %s75
      %p84 = scmp.eq.s32.totalorder %s22, 0
      %p85 = por %p83, %p84
      %p86 = scmp.ne.s32.totalorder %s74, %s75
      %p87 = scmp.eq.s32.totalorder %s23, 1
      %p88 = por %p86, %p87
      %p90 = scmp.ne.s32.totalorder %s75, %s89
      %p91 = scmp.eq.s32.totalorder %s23, 0
      %p92 = por %p90, %p91
      %s94 = sadd.s32 %s93, 1
      %p97 = scmp.eq.s32.totalorder %s17, 1
      %p98 = scmp.ne.s32.totalorder %s93, %s95
      %p99 = scmp.eq.s32.totalorder %s17, 0
      %p100 = por %p98, %p99
      %p101 = scmp.ne.s32.totalorder %s93, %s95
      %p102 = scmp.eq.s32.totalorder %s22, 1
      %p103 = por %p101, %p102
      %p104 = scmp.ne.s32.totalorder %s95, %s96
      %p105 = scmp.eq.s32.totalorder %s22, 0
      %p106 = por %p104, %p105
      %p107 = scmp.ne.s32.totalorder %s95, %s96
      %p108 = scmp.eq.s32.totalorder %s23, 1
      %p109 = por %p107, %p108
      %p111 = scmp.ne.s32.totalorder %s96, %s110
      %p112 = scmp.eq.s32.totalorder %s23, 0
      %p113 = por %p111, %p112
      %s115 = sadd.s32 %s114, 1
      %p118 = scmp.eq.s32.totalorder %s17, 1
      %p119 = scmp.ne.s32.totalorder %s114, %s116
      %p120 = scmp.eq.s32.totalorder %s17, 0
      %p121 = por %p119, %p120
      %p122 = scmp.ne.s32.totalorder %s114, %s116
      %p123 = scmp.eq.s32.totalorder %s22, 1
      %p124 = por %p122, %p123
      %p125 = scmp.ne.s32.totalorder %s116, %s117
      %p126 = scmp.eq.s32.totalorder %s22, 0
      %p127 = por %p125, %p126
      %p128 = scmp.ne.s32.totalorder %s116, %s117
      %p129 = scmp.eq.s32.totalorder %s23, 1
      %p130 = por %p128, %p129
      %p132 = scmp.ne.s32.totalorder %s117, %s131
      %p133 = scmp.eq.s32.totalorder %s23, 0
      %p134 = por %p132, %p133
      %s136 = sadd.s32 %s135, 1
      %p139 = scmp.eq.s32.totalorder %s17, 1
      %p140 = scmp.ne.s32.totalorder %s135, %s137
      %p141 = scmp.eq.s32.totalorder %s17, 0
      %p142 = por %p140, %p141
      %p143 = scmp.ne.s32.totalorder %s135, %s137
      %p144 = scmp.eq.s32.totalorder %s22, 1
      %p145 = por %p143, %p144
      %p146 = scmp.ne.s32.totalorder %s137, %s138
      %p147 = scmp.eq.s32.totalorder %s22, 0
      %p148 = por %p146, %p147
      %p149 = scmp.ne.s32.totalorder %s137, %s138
      %p150 = scmp.eq.s32.totalorder %s23, 1
      %p151 = por %p149, %p150
      %p153 = scmp.ne.s32.totalorder %s138, %s152
      %p154 = scmp.eq.s32.totalorder %s23, 0
      %p155 = por %p153, %p154
      %s157 = sadd.s32 %s156, 1
      %p160 = scmp.eq.s32.totalorder %s17, 1
      %p161 = scmp.ne.s32.totalorder %s156, %s158
      %p162 = scmp.eq.s32.totalorder %s17, 0
      %p163 = por %p161, %p162
      %p164 = scmp.ne.s32.totalorder %s156, %s158
      %p165 = scmp.eq.s32.totalorder %s22, 1
      %p166 = por %p164, %p165
      %p167 = scmp.ne.s32.totalorder %s158, %s159
      %p168 = scmp.eq.s32.totalorder %s22, 0
      %p169 = por %p167, %p168
      %p170 = scmp.ne.s32.totalorder %s158, %s159
      %p171 = scmp.eq.s32.totalorder %s23, 1
      %p172 = por %p170, %p171
      %p174 = scmp.ne.s32.totalorder %s159, %s173
      %p175 = scmp.eq.s32.totalorder %s23, 0
      %p176 = por %p174, %p175
      %s178 = sadd.s32 %s177, 1
      %p181 = scmp.eq.s32.totalorder %s17, 1
      %p182 = scmp.ne.s32.totalorder %s177, %s179
      %p183 = scmp.eq.s32.totalorder %s17, 0
      %p184 = por %p182, %p183
      %p185 = scmp.ne.s32.totalorder %s177, %s179
      %p186 = scmp.eq.s32.totalorder %s22, 1
      %p187 = por %p185, %p186
      %p188 = scmp.ne.s32.totalorder %s179, %s180
      %p189 = scmp.eq.s32.totalorder %s22, 0
      %p190 = por %p188, %p189
      %p191 = scmp.ne.s32.totalorder %s179, %s180
      %p192 = scmp.eq.s32.totalorder %s23, 1
      %p193 = por %p191, %p192
      %p195 = scmp.ne.s32.totalorder %s180, %s194
      %p196 = scmp.eq.s32.totalorder %s23, 0
      %p197 = por %p195, %p196
      %s198 = ssub.s32 %s17, %s24
      %p199 = scmp.eq.s32.totalorder %s198, 0
      %s201 = sadd.s32 %s200, 1
      %s202 = scalar_select %p199, %s200, %s201
      %p205 = pneg %p199
      %p206 = scmp.eq.s32.totalorder %s17, 1
      %p207 = por %p205, %p206
      %p208 = scmp.ne.s32.totalorder %s200, %s203
      %p209 = scmp.eq.s32.totalorder %s17, 0
      %p210 = por %p208, %p209
      %p211 = scmp.ne.s32.totalorder %s200, %s203
      %p212 = scmp.eq.s32.totalorder %s22, 1
      %p213 = por %p211, %p212
      %p214 = scmp.ne.s32.totalorder %s203, %s204
      %p215 = scmp.eq.s32.totalorder %s22, 0
      %p216 = por %p214, %p215
      %p217 = scmp.ne.s32.totalorder %s203, %s204
      %p218 = scmp.eq.s32.totalorder %s23, 1
      %p219 = por %p217, %p218
      %p221 = scmp.ne.s32.totalorder %s204, %s220
      %p222 = scmp.eq.s32.totalorder %s23, 0
      %p223 = por %p221, %p222
      %p224 = scmp.le.s32.totalorder 1, %s17
      %p225 = scmp.lt.s32.totalorder %s17, 3
      %p226 = pnand %p224, %p225
      %p227 = pneg %p226
      // Predicated region
      $region9: #{tpu_custom_call.1} parent=5 // pred_check
        _
      $region10: #{tpu_custom_call.1} parent=5 // pred_check_branch
        %229 = sbr.rel (%p226) target = $region12
      $region11: #{tpu_custom_call.1} parent=5 // pred_region
        %s230 = ssub.s32 %s17, 1
        // Predicated region
        $region13: #{tpu_custom_call.1} parent=11 // pred_check
          %p231 = pneg %p64
        $region14: #{tpu_custom_call.1} parent=11 // pred_check_branch
          %233 = sbr.rel (%p231) target = $region16
        $region15: #{tpu_custom_call.1} parent=11 // pred_region
          _
        $region16: #{tpu_custom_call.1} parent=11 // pred_fallthru
          _
        // Predicated region
        $region17: #{tpu_custom_call.1} parent=11 // pred_check
          %p234 = pneg %p85
        $region18: #{tpu_custom_call.1} parent=11 // pred_check_branch
          %236 = sbr.rel (%p234) target = $region20
        $region19: #{tpu_custom_call.1} parent=11 // pred_region
          _
        $region20: #{tpu_custom_call.1} parent=11 // pred_fallthru
          _
        // Predicated region
        $region21: #{tpu_custom_call.1} parent=11 // pred_check
          %p237 = pneg %p106
        $region22: #{tpu_custom_call.1} parent=11 // pred_check_branch
          %239 = sbr.rel (%p237) target = $region24
        $region23: #{tpu_custom_call.1} parent=11 // pred_region
          _
        $region24: #{tpu_custom_call.1} parent=11 // pred_fallthru
          _
        // Predicated region
        $region25: #{tpu_custom_call.1} parent=11 // pred_check
          %p240 = pneg %p127
        $region26: #{tpu_custom_call.1} parent=11 // pred_check_branch
          %242 = sbr.rel (%p240) target = $region28
        $region27: #{tpu_custom_call.1} parent=11 // pred_region
          _
        $region28: #{tpu_custom_call.1} parent=11 // pred_fallthru
          _
        // Predicated region
        $region29: #{tpu_custom_call.1} parent=11 // pred_check
          %p243 = pneg %p148
        $region30: #{tpu_custom_call.1} parent=11 // pred_check_branch
          %245 = sbr.rel (%p243) target = $region32
        $region31: #{tpu_custom_call.1} parent=11 // pred_region
          _
        $region32: #{tpu_custom_call.1} parent=11 // pred_fallthru
          _
        // Predicated region
        $region33: #{tpu_custom_call.1} parent=11 // pred_check
          %p246 = pneg %p169
        $region34: #{tpu_custom_call.1} parent=11 // pred_check_branch
          %248 = sbr.rel (%p246) target = $region36
        $region35: #{tpu_custom_call.1} parent=11 // pred_region
          _
        $region36: #{tpu_custom_call.1} parent=11 // pred_fallthru
          _
        // Predicated region
        $region37: #{tpu_custom_call.1} parent=11 // pred_check
          %p249 = pneg %p190
        $region38: #{tpu_custom_call.1} parent=11 // pred_check_branch
          %251 = sbr.rel (%p249) target = $region40
        $region39: #{tpu_custom_call.1} parent=11 // pred_region
          _
        $region40: #{tpu_custom_call.1} parent=11 // pred_fallthru
          _
      $region12: #{tpu_custom_call.1} parent=5 // pred_fallthru
        _
      %p252 = scmp.lt.s32.totalorder %s17, 2
      // Predicated region
      $region41: #{tpu_custom_call.1} parent=5 // pred_check
        %p253 = pneg %p252
      $region42: #{tpu_custom_call.1} parent=5 // pred_check_branch
        %255 = sbr.rel (%p253) target = $region44
      $region43: #{tpu_custom_call.1} parent=5 // pred_region
        // Predicated region
        $region45: #{tpu_custom_call.1} parent=43 // pred_check
          %p256 = pneg %p37
        $region46: #{tpu_custom_call.1} parent=43 // pred_check_branch
          %258 = sbr.rel (%p256) target = $region48
        $region47: #{tpu_custom_call.1} parent=43 // pred_region
          %p259 = scmp.lt.s32.totalorder %s17, 1
          %s260 = scalar_select %p259, %s17, 1
          %s261 = smul.addr %s260, 2
          %s262 = smul.addr %s261, 8
          %s263 = scalar_lea.vmem %s0, %s262
        $region48: #{tpu_custom_call.1} parent=43 // pred_fallthru
          _
      $region44: #{tpu_custom_call.1} parent=5 // pred_fallthru
        _
      %p264 = scmp.le.s32.totalorder 1, %s17
      %p265 = scmp.lt.s32.totalorder %s17, 3
      %p266 = pnand %p264, %p265
      %p267 = pneg %p266
      // Predicated region
      $region49: #{tpu_custom_call.1} parent=5 // pred_check
        _
      $region50: #{tpu_custom_call.1} parent=5 // pred_check_branch
        %269 = sbr.rel (%p266) target = $region52
      $region51: #{tpu_custom_call.1} parent=5 // pred_region
        %s270 = ssub.s32 %s17, 1
        %p271 = scmp.lt.s32.totalorder %s22, 1
        %s272 = scalar_select %p271, %s22, 1
        %s273 = smul.addr %s272, 2
        %s274 = smul.addr %s273, 8
        %s275 = scalar_lea.vmem %s0, %s274
        %p276 = pneg %p43
        %p277 = pneg %p40
        %p278 = pneg %p64
        %p279 = pneg %p61
        %p280 = pneg %p85
        %p281 = pneg %p82
        %p282 = pneg %p106
        %p283 = pneg %p103
        %p284 = pneg %p127
        %p285 = pneg %p124
        %p286 = pneg %p148
        %p287 = pneg %p145
        %p288 = pneg %p169
        %p289 = pneg %p166
        %p290 = pneg %p190
        %p291 = pneg %p187
        %p292 = pneg %p216
        %p293 = pneg %p213
        %s294 = sand.u32 %s203, 1
        %s295 = scalar_lea.sflag [#allocation3], %s294
        %s296 = sand.u32 %s203, 1
        %s297 = smul.addr %s296, 32
        %s298 = scalar_lea.vmem [#allocation2], %s297
        %p299 = scmp.lt.s32.totalorder %s22, 1
        %s300 = scalar_select %p299, %s22, 1
        %s301 = smul.addr %s300, 2
        %s302 = smul.addr %s301, 8
        %s303 = scalar_lea.vmem %s0, %s302
        %v305 = vld [vmem:[%s1] sm:$0xff]
        %v306 = vld [vmem:[%s1 + $0x8] sm:$0xff]
        %v307 = vld [vmem:[%s2] sm:$0xff]
        %v308 = vld [vmem:[%s2 + $0x8] sm:$0xff]
        %v309 = vld [vmem:[%s3] sm:$0xff]
        %v310 = vld [vmem:[%s3 + $0x8] sm:$0xff]
        %v311 = vld [vmem:[%s4] sm:$0xf]
        %v312 = vld [vmem:[%s4 + $0x4] sm:$0xf]
        %v313 = vld [vmem:[%s4 + $0x8] sm:$0xf]
        %v314 = vld [vmem:[%s4 + $0xc] sm:$0xf]
        %v315 = vld [vmem:[%s5] sm:$0xff]
        %v316 = vld [vmem:[%s5 + $0x8] sm:$0xff]
        %v317 = vld [vmem:[%s5 + $0x10] sm:$0xff]
        %v318 = vld [vmem:[%s5 + $0x18] sm:$0xff]
        %v319 = vld [vmem:[%s6] sm:$0xff]
        %v320 = vld [vmem:[%s6 + $0x8] sm:$0xff]
        %v321 = vld [vmem:[%s6 + $0x10] sm:$0xff]
        %v322 = vld [vmem:[%s6 + $0x18] sm:$0xff]
        %v323 = vld [vmem:[%s7] sm:$0xff]
        %v324 = vld [vmem:[%s7 + $0x8] sm:$0xff]
        %v325 = vld [vmem:[%s7 + $0x10] sm:$0xff]
        %v326 = vld [vmem:[%s7 + $0x18] sm:$0xff]
        %v327 = vlaneseq
        %v328 = vand.u32 %v327, 127
        %vm329 = vcmp.ge.s32.totalorder %v328, 1
        %vm330 = vcmp.lt.s32.totalorder %v328, 127
        %vm331 = vcmp.lt.s32.totalorder %v328, 126
        %v332 = vld [vmem:[%s303] sm:$0xff]
        %v333 = vld [vmem:[%s303 + $0x8] sm:$0xff]
        %334 = vrot.lane.b32.xlu0 %v332, 1
        %v335 = vpop.permute.xlu0 %334
        %336 = vrot.lane.b32.xlu0 %v333, 1
        %v337 = vpop.permute.xlu0 %336
        %v338 = vsel %vm329, 1, 0
        %vm339 = vcmp.eq.s32.totalorder %v338, 1
        %v340 = vsel %vm339, %v335, 0.0
        %v341 = vsel %vm339, %v337, 0.0
        %343 = vset.pattern.permute.xlu0 0
        %344 = vperm.xlu0 %343, %v305
        %v345 = vpop.permute.xlu0 %344
        %348 = vset.pattern.permute.xlu0 0
        %349 = vperm.xlu0 %348, %v306
        %v350 = vpop.permute.xlu0 %349
        %v352 = vmul.f32 %v345, %v340
        %v353 = vmul.f32 %v350, %v341
        %354 = vset.pattern.permute.xlu0 1
        %355 = vperm.xlu0 %354, %v305
        %v356 = vpop.permute.xlu0 %355
        %358 = vset.pattern.permute.xlu0 1
        %359 = vperm.xlu0 %358, %v306
        %v360 = vpop.permute.xlu0 %359
        %v362 = vmul.f32 %v356, %v332
        %v363 = vmul.f32 %v360, %v333
        %v364 = vadd.f32 %v352, %v362
        %v365 = vadd.f32 %v353, %v363
        %366 = vrot.lane.b32.xlu0 %v332, 127
        %v367 = vpop.permute.xlu0 %366
        %368 = vrot.lane.b32.xlu0 %v333, 127
        %v369 = vpop.permute.xlu0 %368
        %v370 = vsel %vm330, 1, 0
        %vm371 = vcmp.eq.s32.totalorder %v370, 1
        %v372 = vsel %vm371, %v367, 0.0
        %v373 = vsel %vm371, %v369, 0.0
        %374 = vset.pattern.permute.xlu0 2
        %375 = vperm.xlu0 %374, %v305
        %v376 = vpop.permute.xlu0 %375
        %378 = vset.pattern.permute.xlu0 2
        %379 = vperm.xlu0 %378, %v306
        %v380 = vpop.permute.xlu0 %379
        %v382 = vmul.f32 %v376, %v372
        %v383 = vmul.f32 %v380, %v373
        %v384 = vadd.f32 %v364, %v382
        %v385 = vadd.f32 %v365, %v383
        %386 = vrot.lane.b32.xlu0 %v332, 126
        %v387 = vpop.permute.xlu0 %386
        %388 = vrot.lane.b32.xlu0 %v333, 126
        %v389 = vpop.permute.xlu0 %388
        %v390 = vsel %vm331, 1, 0
        %vm391 = vcmp.eq.s32.totalorder %v390, 1
        %v392 = vsel %vm391, %v387, 0.0
        %v393 = vsel %vm391, %v389, 0.0
        %394 = vset.pattern.permute.xlu0 3
        %395 = vperm.xlu0 %394, %v305
        %v396 = vpop.permute.xlu0 %395
        %398 = vset.pattern.permute.xlu0 3
        %399 = vperm.xlu0 %398, %v306
        %v400 = vpop.permute.xlu0 %399
        %v402 = vmul.f32 %v396, %v392
        %v403 = vmul.f32 %v400, %v393
        %v404 = vadd.f32 %v384, %v402
        %v405 = vadd.f32 %v385, %v403
        %v406 = vmax.f32 %v404, 0.0
        %v407 = vmax.f32 %v405, 0.0
        %409 = vset.pattern.permute.xlu0 0
        %410 = vperm.xlu0 %409, %v307
        %v411 = vpop.permute.xlu0 %410
        %414 = vset.pattern.permute.xlu0 0
        %415 = vperm.xlu0 %414, %v308
        %v416 = vpop.permute.xlu0 %415
        %v418 = vmul.f32 %v406, %v411
        %v419 = vmul.f32 %v407, %v416
        %421 = vset.pattern.permute.xlu0 0
        %422 = vperm.xlu0 %421, %v309
        %v423 = vpop.permute.xlu0 %422
        %426 = vset.pattern.permute.xlu0 0
        %427 = vperm.xlu0 %426, %v310
        %v428 = vpop.permute.xlu0 %427
        %v430 = vadd.f32 %v418, %v423
        %v431 = vadd.f32 %v419, %v428
        %v432 = vadd.f32 %v430, %v332
        %v433 = vadd.f32 %v431, %v333
        %v434 = vpack.c.bf16 %v433, %v432
        %436 = vset.pattern.permute.xlu0 0
        %437 = vperm.xlu0 %436, %v315
        %v438 = vpop.permute.xlu0 %437
        %441 = vset.pattern.permute.xlu0 0
        %442 = vperm.xlu0 %441, %v316
        %v443 = vpop.permute.xlu0 %442
        %446 = vset.pattern.permute.xlu0 0
        %447 = vperm.xlu0 %446, %v317
        %v448 = vpop.permute.xlu0 %447
        %451 = vset.pattern.permute.xlu0 0
        %452 = vperm.xlu0 %451, %v318
        %v453 = vpop.permute.xlu0 %452
        %v459 = vunpack.c.l.b16 %v311
        %v460 = vunpack.c.l.b16 %v312
        %v461 = vunpack.c.l.b16 %v313
        %v462 = vunpack.c.l.b16 %v314
        %v463 = vpack.c.b16 %v460, %v459
        %v464 = vpack.c.b16 %v462, %v461
        %vm465 = vcmask 130048
        %v467 = vsel %vm465, %v463, 0
        %v470 = vsel %vm465, %v464, 0
        %472 = vmatprep.subr.bf16.mxu0 0
        %473 = vmatpush1.bf16.msra.mxu0 %v434
        %474 = vmatprep.subr.bf16.mxu0 0
        %475 = vmatpush1.bf16.msra.mxu0 0
        %476 = vmatprep.subr.bf16.mxu0 0
        %477 = vmatpush1.bf16.msra.mxu0 0
        %478 = vmatprep.subr.bf16.mxu0 0
        %479 = vmatpush1.bf16.msra.mxu0 0
        %480 = vmatprep.subr.bf16.mxu0 0
        %481 = vmatpush1.bf16.msra.mxu0 0
        %482 = vmatprep.subr.bf16.mxu0 0
        %483 = vmatpush1.bf16.msra.mxu0 0
        %484 = vmatprep.subr.bf16.mxu0 0
        %485 = vmatpush1.bf16.msra.mxu0 0
        %486 = vmatprep.subr.bf16.mxu0 0
        %487 = vmatpush1.bf16.msra.mxu0 0
        %488 = vmatprep.subr.bf16.mxu0 0
        %489 = vmatpush1.bf16.msra.mxu0 0
        %490 = vmatprep.subr.bf16.mxu0 0
        %491 = vmatpush1.bf16.msra.mxu0 0
        %492 = vmatprep.subr.bf16.mxu0 0
        %493 = vmatpush1.bf16.msra.mxu0 0
        %494 = vmatprep.subr.bf16.mxu0 0
        %495 = vmatpush1.bf16.msra.mxu0 0
        %496 = vmatprep.subr.bf16.mxu0 0
        %497 = vmatpush1.bf16.msra.mxu0 0
        %498 = vmatprep.subr.bf16.mxu0 0
        %499 = vmatpush1.bf16.msra.mxu0 0
        %500 = vmatprep.subr.bf16.mxu0 0
        %501 = vmatpush1.bf16.msra.mxu0 0
        %502 = vmatprep.subr.bf16.mxu0 0
        %503 = vmatpush1.bf16.msra.mxu0 0
        %504 = vmatprep.mubr.bf16.mxu0 0
        %505 = vmatmul.mubr.bf16.gmra.mrb[0].mxu0 %v467
        %v506 = vpop.f32.mrb[0].mxu0
        %v507 = vadd.f32 %v438, %v506
        %v508 = vpop.f32.mrb[0].mxu0
        %v509 = vpop.f32.mrb[0].mxu0
        %v510 = vadd.f32 %v443, %v509
        %v511 = vpop.f32.mrb[0].mxu0
        %512 = vmatprep.mubr.bf16.mxu0 0
        %513 = vmatmul.mubr.bf16.gmra.mrb[0].mxu0 %v470
        %v514 = vpop.f32.mrb[0].mxu0
        %v515 = vadd.f32 %v448, %v514
        %v516 = vpop.f32.mrb[0].mxu0
        %v517 = vpop.f32.mrb[0].mxu0
        %v518 = vadd.f32 %v453, %v517
        %v519 = vpop.f32.mrb[0].mxu0
        %520 = vdwg.mxu0
        %v521 = vmax.f32 %v507, 0.0
        %v522 = vmax.f32 %v510, 0.0
        %v523 = vmax.f32 %v515, 0.0
        %v524 = vmax.f32 %v518, 0.0
        %526 = vset.pattern.permute.xlu0 0
        %527 = vperm.xlu0 %526, %v319
        %v528 = vpop.permute.xlu0 %527
        %531 = vset.pattern.permute.xlu0 0
        %532 = vperm.xlu0 %531, %v320
        %v533 = vpop.permute.xlu0 %532
        %536 = vset.pattern.permute.xlu0 0
        %537 = vperm.xlu0 %536, %v321
        %v538 = vpop.permute.xlu0 %537
        %541 = vset.pattern.permute.xlu0 0
        %542 = vperm.xlu0 %541, %v322
        %v543 = vpop.permute.xlu0 %542
        %v545 = vmul.f32 %v521, %v528
        %v546 = vmul.f32 %v522, %v533
        %v547 = vmul.f32 %v523, %v538
        %v548 = vmul.f32 %v524, %v543
        %550 = vset.pattern.permute.xlu0 0
        %551 = vperm.xlu0 %550, %v323
        %v552 = vpop.permute.xlu0 %551
        %555 = vset.pattern.permute.xlu0 0
        %556 = vperm.xlu0 %555, %v324
        %v557 = vpop.permute.xlu0 %556
        %560 = vset.pattern.permute.xlu0 0
        %561 = vperm.xlu0 %560, %v325
        %v562 = vpop.permute.xlu0 %561
        %565 = vset.pattern.permute.xlu0 0
        %566 = vperm.xlu0 %565, %v326
        %v567 = vpop.permute.xlu0 %566
        %v569 = vadd.f32 %v545, %v552
        %v570 = vadd.f32 %v546, %v557
        %v571 = vadd.f32 %v547, %v562
        %v572 = vadd.f32 %v548, %v567
        %573 = vst [vmem:[%s298] sm:$0xff] %v569
        %574 = vst [vmem:[%s298 + $0x8] sm:$0xff] %v570
        %575 = vst [vmem:[%s298 + $0x10] sm:$0xff] %v571
        %576 = vst [vmem:[%s298 + $0x18] sm:$0xff] %v572
        %s577 = sand.u32 %s203, 1
        %s578 = scalar_lea.sflag [#allocation3], %s577
        %s579 = sand.u32 %s203, 1
        %s580 = smul.addr %s579, 32
        %s581 = scalar_lea.vmem [#allocation2], %s580
        // Predicated region
        $region53: #{tpu_custom_call.1} parent=51 // pred_check
          %p582 = pneg %p213
        $region54: #{tpu_custom_call.1} parent=51 // pred_check_branch
          %584 = sbr.rel (%p582) target = $region56
        $region55: #{tpu_custom_call.1} parent=51 // pred_region
          %s586 = ssub.s32 512, 512
          %587 = vsyncadd %s578, %s586
          %s588 = smul.addr %s22, 4
          %s589 = smul.addr %s588, 128
          %s590 = scalar_lea.hbm %s8, %s589
          %s591 = sshll.u32 %s581, 4
          %s592 = int_to_ptr.vmem [resolvable:$true] %s591
          %597 = dma.vmem_to_hbm [thread:$0]  %s592, 512, %s590, %s578, 128, 128, 8
        $region56: #{tpu_custom_call.1} parent=51 // pred_fallthru
          _
      $region52: #{tpu_custom_call.1} parent=5 // pred_fallthru
        _
      %p598 = scmp.le.s32.totalorder 2, %s17
      // Predicated region
      $region57: #{tpu_custom_call.1} parent=5 // pred_check
        %p599 = pneg %p598
      $region58: #{tpu_custom_call.1} parent=5 // pred_check_branch
        %601 = sbr.rel (%p599) target = $region60
      $region59: #{tpu_custom_call.1} parent=5 // pred_region
        %s602 = ssub.s32 %s17, 2
        // Predicated region
        $region61: #{tpu_custom_call.1} parent=59 // pred_check
          %p603 = pneg %p219
        $region62: #{tpu_custom_call.1} parent=59 // pred_check_branch
          %605 = sbr.rel (%p603) target = $region64
        $region63: #{tpu_custom_call.1} parent=59 // pred_region
          %s606 = sand.u32 %s204, 1
          %s607 = scalar_lea.sflag [#allocation3], %s606
          %s608 = sand.u32 %s204, 1
          %s609 = smul.addr %s608, 32
          %s610 = scalar_lea.vmem [#allocation2], %s609
          %611 = dma.done %s607, 512
        $region64: #{tpu_custom_call.1} parent=59 // pred_fallthru
          _
      $region60: #{tpu_custom_call.1} parent=5 // pred_fallthru
        _
    $region6: #{tpu_custom_call.1} parent=1 // loop_footer
      %s21 = sadd.s32 1, %s17
    $region7: #{tpu_custom_call.1} parent=1 // loop_footer_branch
      %16 = sbr.rel target = $region3
    $region8: #{tpu_custom_call.1} parent=1 // loop_exit
      _
    %612 = vsyncpa [#allocation3], 1
    %s613 = scalar_lea.sflag [#allocation3], 1
    %614 = vsyncpa %s613, 1

</llo_original>
